<compile_context>
chip_gen: v7x
topology: tpu7x:2x2x1
jax: 0.10.0
libtpu: 0.0.40
codegen_flags: <defaults>
</compile_context>

<pallas_src>
import functools

import jax
import jax.numpy as jnp
from jax.experimental import pallas as pl
from jax.experimental.pallas import tpu as pltpu

LANE = 128     # lane width: last dim padded to a multiple of this
SUBLANE = 8    # sublane width: batch padded to a multiple of this


def _round_up(n, m):
    return (n + m - 1) // m * m


def _fused_mlp_kernel(x_ref, w_ref, b_ref, o_ref, act_ref):
    """Whole MLP in one kernel.

    x_ref:   (Bp, Fp)        padded input activations
    w_ref:   (L, Fp, Fp)     stacked, zero-padded (in, out) weights
    b_ref:   (L, 1, Fp)      stacked, zero-padded biases
    o_ref:   (Bp, Fp)        padded output
    act_ref: VMEM scratch (Bp, Fp) f32 — activation stays resident across layers
    """
    act_ref[...] = x_ref[...].astype(jnp.float32)
    n_layers = w_ref.shape[0]
    # Static Python unroll: L is tiny (n_layers + 2); all operands are VMEM
    # resident, each step is a single MXU matmul + VPU bias add.
    for l in range(n_layers):
        act_ref[...] = (
            jnp.dot(act_ref[...], w_ref[l], preferred_element_type=jnp.float32)
            + b_ref[l]
        )
    o_ref[...] = act_ref[...].astype(o_ref.dtype)


def fused_mlp(x_pad, w_stack, b_stack):
    """Single pallas_call over the whole (padded) network."""
    Bp, Fp = x_pad.shape
    L = w_stack.shape[0]
    return pl.pallas_call(
        _fused_mlp_kernel,
        out_shape=jax.ShapeDtypeStruct((Bp, Fp), x_pad.dtype),
        grid=(1,),
        in_specs=[
            pl.BlockSpec((Bp, Fp), lambda i: (0, 0)),
            pl.BlockSpec((L, Fp, Fp), lambda i: (0, 0, 0)),
            pl.BlockSpec((L, 1, Fp), lambda i: (0, 0, 0)),
        ],
        out_specs=pl.BlockSpec((Bp, Fp), lambda i: (0, 0)),
        scratch_shapes=[pltpu.VMEM((Bp, Fp), jnp.float32)],
    )(x_pad, w_stack, b_stack)


def init_params(key, input_size, hidden_size, output_size, n_layers,
                dtype=jnp.float32):
    """Deterministic init matching nn.Sequential(Linear...) layer shapes.

    PyTorch nn.Linear default init is U(-1/sqrt(fan_in), 1/sqrt(fan_in)); we
    reproduce that distribution with a fixed JAX key.  Weights are stored as
    (in, out) (transposed vs. torch's (out, in)), zero-padded to (Fp, Fp) and
    stacked into one array; biases are zero-padded to (1, Fp) and stacked.
    Returns (w_stack, b_stack, raw_params) where raw_params is the unpadded
    [(w, b), ...] list used for the pure-JAX reference.
    """
    dims = ([input_size, hidden_size]
            + [hidden_size] * n_layers
            + [output_size])
    L = len(dims) - 1
    Fp = _round_up(max(dims), LANE)

    w_stack = jnp.zeros((L, Fp, Fp), dtype)
    b_stack = jnp.zeros((L, 1, Fp), dtype)
    raw_params = []
    for i in range(L):
        fan_in, fan_out = dims[i], dims[i + 1]
        key, kw, kb = jax.random.split(key, 3)
        bound = 1.0 / (fan_in ** 0.5)
        w = jax.random.uniform(kw, (fan_in, fan_out), dtype,
                               minval=-bound, maxval=bound)
        b = jax.random.uniform(kb, (fan_out,), dtype,
                               minval=-bound, maxval=bound)
        raw_params.append((w, b))
        # Zero padding: padded input columns are zero in x, padded weight
        # columns/rows are zero, padded bias entries are zero -> padded output
        # columns stay exactly zero layer after layer (no perturbation).
        w_stack = w_stack.at[i, :fan_in, :fan_out].set(w)
        b_stack = b_stack.at[i, 0, :fan_out].set(b)
    return w_stack, b_stack, raw_params


@functools.partial(jax.jit, static_argnames=("output_size",))
def my_model_forward(x, w_stack, b_stack, *, output_size):
    """Forward pass of MyModel: purely sequential Linear layers."""
    B, F = x.shape
    Fp = w_stack.shape[-1]
    Bp = _round_up(B, SUBLANE)
    x_pad = jnp.zeros((Bp, Fp), x.dtype).at[:B, :F].set(x)
    y_pad = fused_mlp(x_pad, w_stack, b_stack)
    return y_pad[:B, :output_size]


if __name__ == "__main__":
    # Small shapes consistent with the module's forward:
    # batch=8, input_size=32, hidden_size=32, n_layers=2, output_size=16
    batch, input_size, hidden_size, n_layers, output_size = 8, 32, 32, 2, 16

    key = jax.random.PRNGKey(0)
    key, kx = jax.random.split(key)
    x = jax.random.normal(kx, (batch, input_size), jnp.float32)
    w_stack, b_stack, raw_params = init_params(
        key, input_size, hidden_size, output_size, n_layers)

    out = my_model_forward(x, w_stack, b_stack, output_size=output_size)
    out = jax.block_until_ready(out)

    # sanity check against a pure-JAX reference of the same stacked linears
    ref = x
    for (w, b) in raw_params:
        ref = ref @ w + b
    assert out.shape == (batch, output_size)
    assert jnp.allclose(out, ref, atol=1e-4, rtol=1e-4)

    print("KERNEL_OK")
</pallas_src>

<mosaic_0001>
module attributes {stable_mosaic.version = 11 : i64} {
  func.func @_fused_mlp_kernel(%arg0: i32, %arg1: memref<8x128xf32, #tpu.memory_space<vmem>>, %arg2: memref<4x128x128xf32, #tpu.memory_space<vmem>>, %arg3: memref<4x1x128xf32, #tpu.memory_space<vmem>>, %arg4: memref<8x128xf32, #tpu.memory_space<vmem>>, %arg5: memref<8x128xf32, #tpu.memory_space<vmem>>) attributes {dimension_semantics = [#tpu.dimension_semantics<arbitrary>], iteration_bounds = array<i64: 1>, scalar_prefetch = 0 : i64, scratch_operands = 1 : i64, tpu.core_type = #tpu.core_type<tc>, window_params = [{pipeline_mode = #tpu.pipeline_mode<synchronous>, transform_indices = @transform_0, window_bounds = array<i64: 8, 128>}, {pipeline_mode = #tpu.pipeline_mode<synchronous>, transform_indices = @transform_1, window_bounds = array<i64: 4, 128, 128>}, {pipeline_mode = #tpu.pipeline_mode<synchronous>, transform_indices = @transform_2, window_bounds = array<i64: 4, 1, 128>}, {pipeline_mode = #tpu.pipeline_mode<synchronous>, transform_indices = @transform_3, window_bounds = array<i64: 8, 128>}]} {
    %c0 = arith.constant 0 : index
    %c0_0 = arith.constant 0 : index
    %0 = vector.load %arg1[%c0, %c0_0] : memref<8x128xf32, #tpu.memory_space<vmem>>, vector<8x128xf32>
    %c0_1 = arith.constant 0 : index
    %c0_2 = arith.constant 0 : index
    %1 = vector.load %arg5[%c0_1, %c0_2] : memref<8x128xf32, #tpu.memory_space<vmem>>, vector<8x128xf32>
    tpu.vector_store %arg5[%c0_1, %c0_2], %0 {strides = array<i32>} : memref<8x128xf32, #tpu.memory_space<vmem>>, vector<8x128xf32>,
    %c0_3 = arith.constant 0 : index
    %c0_4 = arith.constant 0 : index
    %2 = vector.load %arg5[%c0_3, %c0_4] : memref<8x128xf32, #tpu.memory_space<vmem>>, vector<8x128xf32>
    %c0_5 = arith.constant 0 : index
    %c0_6 = arith.constant 0 : index
    %c0_7 = arith.constant 0 : index
    %3 = vector.load %arg2[%c0_5, %c0_6, %c0_7] : memref<4x128x128xf32, #tpu.memory_space<vmem>>, vector<1x128x128xf32>
    %4 = vector.shape_cast %3 : vector<1x128x128xf32> to vector<128x128xf32>
    %cst = arith.constant dense<0.000000e+00> : vector<8x128xf32>
    %5 = tpu.matmul %2, %4, %cst {dimension_numbers = #tpu.dot_dimension_numbers<[1], [0], [0], [1], [0, 0, 1, 1], [], []>} : vector<8x128xf32>, vector<128x128xf32>, vector<8x128xf32> -> vector<8x128xf32>
    %c0_8 = arith.constant 0 : index
    %c0_9 = arith.constant 0 : index
    %c0_10 = arith.constant 0 : index
    %6 = vector.load %arg3[%c0_8, %c0_9, %c0_10] : memref<4x1x128xf32, #tpu.memory_space<vmem>>, vector<1x1x128xf32>
    %7 = vector.shape_cast %6 : vector<1x1x128xf32> to vector<1x128xf32>
    %8 = vector.broadcast %7 : vector<1x128xf32> to vector<8x128xf32>
    %9 = arith.addf %5, %8 : vector<8x128xf32>
    %c0_11 = arith.constant 0 : index
    %c0_12 = arith.constant 0 : index
    %10 = vector.load %arg5[%c0_11, %c0_12] : memref<8x128xf32, #tpu.memory_space<vmem>>, vector<8x128xf32>
    tpu.vector_store %arg5[%c0_11, %c0_12], %9 {strides = array<i32>} : memref<8x128xf32, #tpu.memory_space<vmem>>, vector<8x128xf32>,
    %c0_13 = arith.constant 0 : index
    %c0_14 = arith.constant 0 : index
    %11 = vector.load %arg5[%c0_13, %c0_14] : memref<8x128xf32, #tpu.memory_space<vmem>>, vector<8x128xf32>
    %c1 = arith.constant 1 : index
    %c0_15 = arith.constant 0 : index
    %c0_16 = arith.constant 0 : index
    %12 = vector.load %arg2[%c1, %c0_15, %c0_16] : memref<4x128x128xf32, #tpu.memory_space<vmem>>, vector<1x128x128xf32>
    %13 = vector.shape_cast %12 : vector<1x128x128xf32> to vector<128x128xf32>
    %cst_17 = arith.constant dense<0.000000e+00> : vector<8x128xf32>
    %14 = tpu.matmul %11, %13, %cst_17 {dimension_numbers = #tpu.dot_dimension_numbers<[1], [0], [0], [1], [0, 0, 1, 1], [], []>} : vector<8x128xf32>, vector<128x128xf32>, vector<8x128xf32> -> vector<8x128xf32>
    %c1_18 = arith.constant 1 : index
    %c0_19 = arith.constant 0 : index
    %c0_20 = arith.constant 0 : index
    %15 = vector.load %arg3[%c1_18, %c0_19, %c0_20] : memref<4x1x128xf32, #tpu.memory_space<vmem>>, vector<1x1x128xf32>
    %16 = vector.shape_cast %15 : vector<1x1x128xf32> to vector<1x128xf32>
    %17 = vector.broadcast %16 : vector<1x128xf32> to vector<8x128xf32>
    %18 = arith.addf %14, %17 : vector<8x128xf32>
    %c0_21 = arith.constant 0 : index
    %c0_22 = arith.constant 0 : index
    %19 = vector.load %arg5[%c0_21, %c0_22] : memref<8x128xf32, #tpu.memory_space<vmem>>, vector<8x128xf32>
    tpu.vector_store %arg5[%c0_21, %c0_22], %18 {strides = array<i32>} : memref<8x128xf32, #tpu.memory_space<vmem>>, vector<8x128xf32>,
    %c0_23 = arith.constant 0 : index
    %c0_24 = arith.constant 0 : index
    %20 = vector.load %arg5[%c0_23, %c0_24] : memref<8x128xf32, #tpu.memory_space<vmem>>, vector<8x128xf32>
    %c2 = arith.constant 2 : index
    %c0_25 = arith.constant 0 : index
    %c0_26 = arith.constant 0 : index
    %21 = vector.load %arg2[%c2, %c0_25, %c0_26] : memref<4x128x128xf32, #tpu.memory_space<vmem>>, vector<1x128x128xf32>
    %22 = vector.shape_cast %21 : vector<1x128x128xf32> to vector<128x128xf32>
    %cst_27 = arith.constant dense<0.000000e+00> : vector<8x128xf32>
    %23 = tpu.matmul %20, %22, %cst_27 {dimension_numbers = #tpu.dot_dimension_numbers<[1], [0], [0], [1], [0, 0, 1, 1], [], []>} : vector<8x128xf32>, vector<128x128xf32>, vector<8x128xf32> -> vector<8x128xf32>
    %c2_28 = arith.constant 2 : index
    %c0_29 = arith.constant 0 : index
    %c0_30 = arith.constant 0 : index
    %24 = vector.load %arg3[%c2_28, %c0_29, %c0_30] : memref<4x1x128xf32, #tpu.memory_space<vmem>>, vector<1x1x128xf32>
    %25 = vector.shape_cast %24 : vector<1x1x128xf32> to vector<1x128xf32>
    %26 = vector.broadcast %25 : vector<1x128xf32> to vector<8x128xf32>
    %27 = arith.addf %23, %26 : vector<8x128xf32>
    %c0_31 = arith.constant 0 : index
    %c0_32 = arith.constant 0 : index
    %28 = vector.load %arg5[%c0_31, %c0_32] : memref<8x128xf32, #tpu.memory_space<vmem>>, vector<8x128xf32>
    tpu.vector_store %arg5[%c0_31, %c0_32], %27 {strides = array<i32>} : memref<8x128xf32, #tpu.memory_space<vmem>>, vector<8x128xf32>,
    %c0_33 = arith.constant 0 : index
    %c0_34 = arith.constant 0 : index
    %29 = vector.load %arg5[%c0_33, %c0_34] : memref<8x128xf32, #tpu.memory_space<vmem>>, vector<8x128xf32>
    %c3 = arith.constant 3 : index
    %c0_35 = arith.constant 0 : index
    %c0_36 = arith.constant 0 : index
    %30 = vector.load %arg2[%c3, %c0_35, %c0_36] : memref<4x128x128xf32, #tpu.memory_space<vmem>>, vector<1x128x128xf32>
    %31 = vector.shape_cast %30 : vector<1x128x128xf32> to vector<128x128xf32>
    %cst_37 = arith.constant dense<0.000000e+00> : vector<8x128xf32>
    %32 = tpu.matmul %29, %31, %cst_37 {dimension_numbers = #tpu.dot_dimension_numbers<[1], [0], [0], [1], [0, 0, 1, 1], [], []>} : vector<8x128xf32>, vector<128x128xf32>, vector<8x128xf32> -> vector<8x128xf32>
    %c3_38 = arith.constant 3 : index
    %c0_39 = arith.constant 0 : index
    %c0_40 = arith.constant 0 : index
    %33 = vector.load %arg3[%c3_38, %c0_39, %c0_40] : memref<4x1x128xf32, #tpu.memory_space<vmem>>, vector<1x1x128xf32>
    %34 = vector.shape_cast %33 : vector<1x1x128xf32> to vector<1x128xf32>
    %35 = vector.broadcast %34 : vector<1x128xf32> to vector<8x128xf32>
    %36 = arith.addf %32, %35 : vector<8x128xf32>
    %c0_41 = arith.constant 0 : index
    %c0_42 = arith.constant 0 : index
    %37 = vector.load %arg5[%c0_41, %c0_42] : memref<8x128xf32, #tpu.memory_space<vmem>>, vector<8x128xf32>
    tpu.vector_store %arg5[%c0_41, %c0_42], %36 {strides = array<i32>} : memref<8x128xf32, #tpu.memory_space<vmem>>, vector<8x128xf32>,
    %c0_43 = arith.constant 0 : index
    %c0_44 = arith.constant 0 : index
    %38 = vector.load %arg5[%c0_43, %c0_44] : memref<8x128xf32, #tpu.memory_space<vmem>>, vector<8x128xf32>
    %c0_45 = arith.constant 0 : index
    %c0_46 = arith.constant 0 : index
    %39 = vector.load %arg4[%c0_45, %c0_46] : memref<8x128xf32, #tpu.memory_space<vmem>>, vector<8x128xf32>
    tpu.vector_store %arg4[%c0_45, %c0_46], %38 {strides = array<i32>} : memref<8x128xf32, #tpu.memory_space<vmem>>, vector<8x128xf32>,
    return
  }
  func.func @transform_0(%arg0: i32) -> (i32, i32) {
    %c0_i32 = arith.constant 0 : i32
    %c0_i32_0 = arith.constant 0 : i32
    %c0_i32_1 = arith.constant 0 : i32
    return %c0_i32, %c0_i32_0 : i32, i32
  }
  func.func @transform_1(%arg0: i32) -> (i32, i32, i32) {
    %c0_i32 = arith.constant 0 : i32
    %c0_i32_0 = arith.constant 0 : i32
    %c0_i32_1 = arith.constant 0 : i32
    %c0_i32_2 = arith.constant 0 : i32
    return %c0_i32, %c0_i32_0, %c0_i32_1 : i32, i32, i32
  }
  func.func @transform_2(%arg0: i32) -> (i32, i32, i32) {
    %c0_i32 = arith.constant 0 : i32
    %c0_i32_0 = arith.constant 0 : i32
    %c0_i32_1 = arith.constant 0 : i32
    %c0_i32_2 = arith.constant 0 : i32
    return %c0_i32, %c0_i32_0, %c0_i32_1 : i32, i32, i32
  }
  func.func @transform_3(%arg0: i32) -> (i32, i32) {
    %c0_i32 = arith.constant 0 : i32
    %c0_i32_0 = arith.constant 0 : i32
    %c0_i32_1 = arith.constant 0 : i32
    return %c0_i32, %c0_i32_0 : i32, i32
  }
}

</mosaic_0001>

<llo_original>
// kernel: my_model_forward.1
$region0: #{my_model_forward.1}
  #allocation0 [shape = 'u32[]', space=smem, size = 0x4, offset = 0x4, fixed_abs, tag = 'smem constant byte address 0x4 - core index']
  #allocation1 [shape = 'u32[144,128]{1,0:T(1,128)}', space=vmem, size = 0x12000, scoped, tag = 'internal scratch']
  #allocation2 [shape = 'f32[8,128]{1,0:T(8,128)}', space=vmem, size = 0x1000, scoped, tag = 'scratch operand']
  %s0 = inlined_call_operand.vmem [shape: f32[8,128], index: 0, kind: input, shape index: {}]
  %s1 = inlined_call_operand.hbm [shape: f32[4,128,128], index: 1, kind: input, shape index: {}]
  %s2 = inlined_call_operand.vmem [shape: f32[4,1,128], index: 2, kind: input, shape index: {}]
  %s3 = inlined_call_operand.hbm [shape: f32[8,128], index: 3, kind: output, shape index: {}]
  %s4 = sld [smem:[#allocation0]]
  $region26: #{my_model_forward.1} parent=0
    _
  %s6 = ssub.s32 1, %s4
  %s7 = scalar_select 0, %s6, %s4
  $region1: #{my_model_forward.1} parent=0
    #allocation3 [shape = 'u8[262144]{0}', space=vmem, size = 0x40000, scoped, tag = 'input window, operand 1, single buffered']
    #allocation4 [shape = 's32[1]{0}', space=sflag, size = 0x4, scoped, tag = 'scoped memory for my_model_forward.1']
    #allocation5 [shape = 's32[1]{0}', space=sflag, size = 0x4, scoped, tag = 'scoped memory for my_model_forward.1']
    #allocation6 [shape = 'u8[4096]{0}', space=vmem, size = 0x1000, scoped, tag = 'output window, operand 0, single buffered']
    %8 = vsyncpa [#allocation4], 0
    %9 = vsyncpa [#allocation5], 0
    // Predicated region
    $region2: #{my_model_forward.1} parent=1 // pred_check
      _
    $region3: #{my_model_forward.1} parent=1 // pred_check_branch
      %11 = sbr.rel (0) target = $region5
    $region4: #{my_model_forward.1} parent=1 // pred_region
      _
    $region5: #{my_model_forward.1} parent=1 // pred_fallthru
      _
    // Predicated region
    $region6: #{my_model_forward.1} parent=1 // pred_check
      _
    $region7: #{my_model_forward.1} parent=1 // pred_check_branch
      %13 = sbr.rel (0) target = $region9
    $region8: #{my_model_forward.1} parent=1 // pred_region
      %s15 = ssub.s32 8192, 8192
      %16 = vsyncadd [#allocation4], %s15
      %s17 = sshll.u32 [#allocation3], 4
      %s18 = int_to_ptr.vmem [resolvable:$true] %s17
      %23 = dma.hbm_to_vmem [thread:$0]  %s1, 8192, %s18, [#allocation4], 128, 128, 8
    $region9: #{my_model_forward.1} parent=1 // pred_fallthru
      _
    // Predicated region
    $region10: #{my_model_forward.1} parent=1 // pred_check
      _
    $region11: #{my_model_forward.1} parent=1 // pred_check_branch
      %25 = sbr.rel (0) target = $region13
    $region12: #{my_model_forward.1} parent=1 // pred_region
      _
    $region13: #{my_model_forward.1} parent=1 // pred_fallthru
      _
    // Predicated region
    $region14: #{my_model_forward.1} parent=1 // pred_check
      _
    $region15: #{my_model_forward.1} parent=1 // pred_check_branch
      %27 = sbr.rel (0) target = $region17
    $region16: #{my_model_forward.1} parent=1 // pred_region
      %28 = dma.done [#allocation4], 8192
    $region17: #{my_model_forward.1} parent=1 // pred_fallthru
      _
    %v29 = vld [vmem:[%s0] sm:$0xff]
    %30 = vst [vmem:[#allocation2] sm:$0xff] %v29
    %v31 = vld [vmem:[#allocation2] sm:$0xff]
    %v32 = vld [vmem:[#allocation3] sm:$0xff]
    %v33 = vld [vmem:[#allocation3 + $0x8] sm:$0xff]
    %v34 = vld [vmem:[#allocation3 + $0x10] sm:$0xff]
    %v35 = vld [vmem:[#allocation3 + $0x18] sm:$0xff]
    %v36 = vld [vmem:[#allocation3 + $0x20] sm:$0xff]
    %v37 = vld [vmem:[#allocation3 + $0x28] sm:$0xff]
    %v38 = vld [vmem:[#allocation3 + $0x30] sm:$0xff]
    %v39 = vld [vmem:[#allocation3 + $0x38] sm:$0xff]
    %v40 = vld [vmem:[#allocation3 + $0x40] sm:$0xff]
    %v41 = vld [vmem:[#allocation3 + $0x48] sm:$0xff]
    %v42 = vld [vmem:[#allocation3 + $0x50] sm:$0xff]
    %v43 = vld [vmem:[#allocation3 + $0x58] sm:$0xff]
    %v44 = vld [vmem:[#allocation3 + $0x60] sm:$0xff]
    %v45 = vld [vmem:[#allocation3 + $0x68] sm:$0xff]
    %v46 = vld [vmem:[#allocation3 + $0x70] sm:$0xff]
    %v47 = vld [vmem:[#allocation3 + $0x78] sm:$0xff]
    %v48 = vld [vmem:[%s2] sm:$0x1]
    %v50 = vlaneseq
    %v51 = vshrl.u32 %v50, 7
    %v52 = vsub.s32 0, %v51
    %v53 = vrot.slane %v48, %v52
    %55 = vmatprep.subr.mxu0 0.0
    %56 = vmatpush1.msra.mxu0 %v32
    %57 = vmatprep.subr.mxu0 0.0
    %58 = vmatpush1.msra.mxu0 %v33
    %59 = vmatprep.subr.mxu0 0.0
    %60 = vmatpush1.msra.mxu0 %v34
    %61 = vmatprep.subr.mxu0 0.0
    %62 = vmatpush1.msra.mxu0 %v35
    %63 = vmatprep.subr.mxu0 0.0
    %64 = vmatpush1.msra.mxu0 %v36
    %65 = vmatprep.subr.mxu0 0.0
    %66 = vmatpush1.msra.mxu0 %v37
    %67 = vmatprep.subr.mxu0 0.0
    %68 = vmatpush1.msra.mxu0 %v38
    %69 = vmatprep.subr.mxu0 0.0
    %70 = vmatpush1.msra.mxu0 %v39
    %71 = vmatprep.subr.mxu0 0.0
    %72 = vmatpush1.msra.mxu0 %v40
    %73 = vmatprep.subr.mxu0 0.0
    %74 = vmatpush1.msra.mxu0 %v41
    %75 = vmatprep.subr.mxu0 0.0
    %76 = vmatpush1.msra.mxu0 %v42
    %77 = vmatprep.subr.mxu0 0.0
    %78 = vmatpush1.msra.mxu0 %v43
    %79 = vmatprep.subr.mxu0 0.0
    %80 = vmatpush1.msra.mxu0 %v44
    %81 = vmatprep.subr.mxu0 0.0
    %82 = vmatpush1.msra.mxu0 %v45
    %83 = vmatprep.subr.mxu0 0.0
    %84 = vmatpush1.msra.mxu0 %v46
    %85 = vmatprep.subr.mxu0 0.0
    %86 = vmatpush1.msra.mxu0 %v47
    %87 = vmatprep.subr.mxu0 0.0
    %88 = vmatpush1.msra.mxu0 0.0
    %89 = vmatprep.subr.mxu0 0.0
    %90 = vmatpush1.msra.mxu0 0.0
    %91 = vmatprep.subr.mxu0 0.0
    %92 = vmatpush1.msra.mxu0 0.0
    %93 = vmatprep.subr.mxu0 0.0
    %94 = vmatpush1.msra.mxu0 0.0
    %95 = vmatprep.subr.mxu0 0.0
    %96 = vmatpush1.msra.mxu0 0.0
    %97 = vmatprep.subr.mxu0 0.0
    %98 = vmatpush1.msra.mxu0 0.0
    %99 = vmatprep.subr.mxu0 0.0
    %100 = vmatpush1.msra.mxu0 0.0
    %101 = vmatprep.subr.mxu0 0.0
    %102 = vmatpush1.msra.mxu0 0.0
    %103 = vmatprep.subr.mxu0 0.0
    %104 = vmatpush1.msra.mxu0 0.0
    %105 = vmatprep.subr.mxu0 0.0
    %106 = vmatpush1.msra.mxu0 0.0
    %107 = vmatprep.subr.mxu0 0.0
    %108 = vmatpush1.msra.mxu0 0.0
    %109 = vmatprep.subr.mxu0 0.0
    %110 = vmatpush1.msra.mxu0 0.0
    %111 = vmatprep.subr.mxu0 0.0
    %112 = vmatpush1.msra.mxu0 0.0
    %113 = vmatprep.subr.mxu0 0.0
    %114 = vmatpush1.msra.mxu0 0.0
    %115 = vmatprep.subr.mxu0 0.0
    %116 = vmatpush1.msra.mxu0 0.0
    %117 = vmatprep.subr.mxu0 0.0
    %118 = vmatpush1.msra.mxu0 0.0
    %119 = vmatprep.mubr.f32.mxu0 0.0
    %120 = vmatmul.mubr.f32.gmra.mrb[0].mxu0 %v31
    %v121 = vpop.f32.mrb[0].mxu0
    %v122 = vadd.f32 %v53, %v121
    %v123 = vpop.f32.mrb[0].mxu0
    %124 = vdwg.mxu0
    %125 = vst [vmem:[#allocation2] sm:$0xff] %v122
    %v126 = vld [vmem:[#allocation2] sm:$0xff]
    %s127 = scalar_lea.vmem [#allocation3], 128
    %v128 = vld [vmem:[%s127] sm:$0xff]
    %v129 = vld [vmem:[%s127 + $0x8] sm:$0xff]
    %v130 = vld [vmem:[%s127 + $0x10] sm:$0xff]
    %v131 = vld [vmem:[%s127 + $0x18] sm:$0xff]
    %v132 = vld [vmem:[%s127 + $0x20] sm:$0xff]
    %v133 = vld [vmem:[%s127 + $0x28] sm:$0xff]
    %v134 = vld [vmem:[%s127 + $0x30] sm:$0xff]
    %v135 = vld [vmem:[%s127 + $0x38] sm:$0xff]
    %v136 = vld [vmem:[%s127 + $0x40] sm:$0xff]
    %v137 = vld [vmem:[%s127 + $0x48] sm:$0xff]
    %v138 = vld [vmem:[%s127 + $0x50] sm:$0xff]
    %v139 = vld [vmem:[%s127 + $0x58] sm:$0xff]
    %v140 = vld [vmem:[%s127 + $0x60] sm:$0xff]
    %v141 = vld [vmem:[%s127 + $0x68] sm:$0xff]
    %v142 = vld [vmem:[%s127 + $0x70] sm:$0xff]
    %v143 = vld [vmem:[%s127 + $0x78] sm:$0xff]
    %s144 = scalar_lea.vmem %s2, 1
    %v145 = vld [vmem:[%s144] sm:$0x1]
    %v147 = vlaneseq
    %v148 = vshrl.u32 %v147, 7
    %v149 = vsub.s32 0, %v148
    %v150 = vrot.slane %v145, %v149
    %152 = vmatprep.subr.mxu0 0.0
    %153 = vmatpush1.msra.mxu0 %v128
    %154 = vmatprep.subr.mxu0 0.0
    %155 = vmatpush1.msra.mxu0 %v129
    %156 = vmatprep.subr.mxu0 0.0
    %157 = vmatpush1.msra.mxu0 %v130
    %158 = vmatprep.subr.mxu0 0.0
    %159 = vmatpush1.msra.mxu0 %v131
    %160 = vmatprep.subr.mxu0 0.0
    %161 = vmatpush1.msra.mxu0 %v132
    %162 = vmatprep.subr.mxu0 0.0
    %163 = vmatpush1.msra.mxu0 %v133
    %164 = vmatprep.subr.mxu0 0.0
    %165 = vmatpush1.msra.mxu0 %v134
    %166 = vmatprep.subr.mxu0 0.0
    %167 = vmatpush1.msra.mxu0 %v135
    %168 = vmatprep.subr.mxu0 0.0
    %169 = vmatpush1.msra.mxu0 %v136
    %170 = vmatprep.subr.mxu0 0.0
    %171 = vmatpush1.msra.mxu0 %v137
    %172 = vmatprep.subr.mxu0 0.0
    %173 = vmatpush1.msra.mxu0 %v138
    %174 = vmatprep.subr.mxu0 0.0
    %175 = vmatpush1.msra.mxu0 %v139
    %176 = vmatprep.subr.mxu0 0.0
    %177 = vmatpush1.msra.mxu0 %v140
    %178 = vmatprep.subr.mxu0 0.0
    %179 = vmatpush1.msra.mxu0 %v141
    %180 = vmatprep.subr.mxu0 0.0
    %181 = vmatpush1.msra.mxu0 %v142
    %182 = vmatprep.subr.mxu0 0.0
    %183 = vmatpush1.msra.mxu0 %v143
    %184 = vmatprep.subr.mxu0 0.0
    %185 = vmatpush1.msra.mxu0 0.0
    %186 = vmatprep.subr.mxu0 0.0
    %187 = vmatpush1.msra.mxu0 0.0
    %188 = vmatprep.subr.mxu0 0.0
    %189 = vmatpush1.msra.mxu0 0.0
    %190 = vmatprep.subr.mxu0 0.0
    %191 = vmatpush1.msra.mxu0 0.0
    %192 = vmatprep.subr.mxu0 0.0
    %193 = vmatpush1.msra.mxu0 0.0
    %194 = vmatprep.subr.mxu0 0.0
    %195 = vmatpush1.msra.mxu0 0.0
    %196 = vmatprep.subr.mxu0 0.0
    %197 = vmatpush1.msra.mxu0 0.0
    %198 = vmatprep.subr.mxu0 0.0
    %199 = vmatpush1.msra.mxu0 0.0
    %200 = vmatprep.subr.mxu0 0.0
    %201 = vmatpush1.msra.mxu0 0.0
    %202 = vmatprep.subr.mxu0 0.0
    %203 = vmatpush1.msra.mxu0 0.0
    %204 = vmatprep.subr.mxu0 0.0
    %205 = vmatpush1.msra.mxu0 0.0
    %206 = vmatprep.subr.mxu0 0.0
    %207 = vmatpush1.msra.mxu0 0.0
    %208 = vmatprep.subr.mxu0 0.0
    %209 = vmatpush1.msra.mxu0 0.0
    %210 = vmatprep.subr.mxu0 0.0
    %211 = vmatpush1.msra.mxu0 0.0
    %212 = vmatprep.subr.mxu0 0.0
    %213 = vmatpush1.msra.mxu0 0.0
    %214 = vmatprep.subr.mxu0 0.0
    %215 = vmatpush1.msra.mxu0 0.0
    %216 = vmatprep.mubr.f32.mxu0 0.0
    %217 = vmatmul.mubr.f32.gmra.mrb[0].mxu0 %v126
    %v218 = vpop.f32.mrb[0].mxu0
    %v219 = vadd.f32 %v150, %v218
    %v220 = vpop.f32.mrb[0].mxu0
    %221 = vdwg.mxu0
    %222 = vst [vmem:[#allocation2] sm:$0xff] %v219
    %v223 = vld [vmem:[#allocation2] sm:$0xff]
    %s224 = scalar_lea.vmem [#allocation3], 256
    %v225 = vld [vmem:[%s224] sm:$0xff]
    %v226 = vld [vmem:[%s224 + $0x8] sm:$0xff]
    %v227 = vld [vmem:[%s224 + $0x10] sm:$0xff]
    %v228 = vld [vmem:[%s224 + $0x18] sm:$0xff]
    %v229 = vld [vmem:[%s224 + $0x20] sm:$0xff]
    %v230 = vld [vmem:[%s224 + $0x28] sm:$0xff]
    %v231 = vld [vmem:[%s224 + $0x30] sm:$0xff]
    %v232 = vld [vmem:[%s224 + $0x38] sm:$0xff]
    %v233 = vld [vmem:[%s224 + $0x40] sm:$0xff]
    %v234 = vld [vmem:[%s224 + $0x48] sm:$0xff]
    %v235 = vld [vmem:[%s224 + $0x50] sm:$0xff]
    %v236 = vld [vmem:[%s224 + $0x58] sm:$0xff]
    %v237 = vld [vmem:[%s224 + $0x60] sm:$0xff]
    %v238 = vld [vmem:[%s224 + $0x68] sm:$0xff]
    %v239 = vld [vmem:[%s224 + $0x70] sm:$0xff]
    %v240 = vld [vmem:[%s224 + $0x78] sm:$0xff]
    %s241 = scalar_lea.vmem %s2, 2
    %v242 = vld [vmem:[%s241] sm:$0x1]
    %v244 = vlaneseq
    %v245 = vshrl.u32 %v244, 7
    %v246 = vsub.s32 0, %v245
    %v247 = vrot.slane %v242, %v246
    %249 = vmatprep.subr.mxu0 0.0
    %250 = vmatpush1.msra.mxu0 %v225
    %251 = vmatprep.subr.mxu0 0.0
    %252 = vmatpush1.msra.mxu0 %v226
    %253 = vmatprep.subr.mxu0 0.0
    %254 = vmatpush1.msra.mxu0 %v227
    %255 = vmatprep.subr.mxu0 0.0
    %256 = vmatpush1.msra.mxu0 %v228
    %257 = vmatprep.subr.mxu0 0.0
    %258 = vmatpush1.msra.mxu0 %v229
    %259 = vmatprep.subr.mxu0 0.0
    %260 = vmatpush1.msra.mxu0 %v230
    %261 = vmatprep.subr.mxu0 0.0
    %262 = vmatpush1.msra.mxu0 %v231
    %263 = vmatprep.subr.mxu0 0.0
    %264 = vmatpush1.msra.mxu0 %v232
    %265 = vmatprep.subr.mxu0 0.0
    %266 = vmatpush1.msra.mxu0 %v233
    %267 = vmatprep.subr.mxu0 0.0
    %268 = vmatpush1.msra.mxu0 %v234
    %269 = vmatprep.subr.mxu0 0.0
    %270 = vmatpush1.msra.mxu0 %v235
    %271 = vmatprep.subr.mxu0 0.0
    %272 = vmatpush1.msra.mxu0 %v236
    %273 = vmatprep.subr.mxu0 0.0
    %274 = vmatpush1.msra.mxu0 %v237
    %275 = vmatprep.subr.mxu0 0.0
    %276 = vmatpush1.msra.mxu0 %v238
    %277 = vmatprep.subr.mxu0 0.0
    %278 = vmatpush1.msra.mxu0 %v239
    %279 = vmatprep.subr.mxu0 0.0
    %280 = vmatpush1.msra.mxu0 %v240
    %281 = vmatprep.subr.mxu0 0.0
    %282 = vmatpush1.msra.mxu0 0.0
    %283 = vmatprep.subr.mxu0 0.0
    %284 = vmatpush1.msra.mxu0 0.0
    %285 = vmatprep.subr.mxu0 0.0
    %286 = vmatpush1.msra.mxu0 0.0
    %287 = vmatprep.subr.mxu0 0.0
    %288 = vmatpush1.msra.mxu0 0.0
    %289 = vmatprep.subr.mxu0 0.0
    %290 = vmatpush1.msra.mxu0 0.0
    %291 = vmatprep.subr.mxu0 0.0
    %292 = vmatpush1.msra.mxu0 0.0
    %293 = vmatprep.subr.mxu0 0.0
    %294 = vmatpush1.msra.mxu0 0.0
    %295 = vmatprep.subr.mxu0 0.0
    %296 = vmatpush1.msra.mxu0 0.0
    %297 = vmatprep.subr.mxu0 0.0
    %298 = vmatpush1.msra.mxu0 0.0
    %299 = vmatprep.subr.mxu0 0.0
    %300 = vmatpush1.msra.mxu0 0.0
    %301 = vmatprep.subr.mxu0 0.0
    %302 = vmatpush1.msra.mxu0 0.0
    %303 = vmatprep.subr.mxu0 0.0
    %304 = vmatpush1.msra.mxu0 0.0
    %305 = vmatprep.subr.mxu0 0.0
    %306 = vmatpush1.msra.mxu0 0.0
    %307 = vmatprep.subr.mxu0 0.0
    %308 = vmatpush1.msra.mxu0 0.0
    %309 = vmatprep.subr.mxu0 0.0
    %310 = vmatpush1.msra.mxu0 0.0
    %311 = vmatprep.subr.mxu0 0.0
    %312 = vmatpush1.msra.mxu0 0.0
    %313 = vmatprep.mubr.f32.mxu0 0.0
    %314 = vmatmul.mubr.f32.gmra.mrb[0].mxu0 %v223
    %v315 = vpop.f32.mrb[0].mxu0
    %v316 = vadd.f32 %v247, %v315
    %v317 = vpop.f32.mrb[0].mxu0
    %318 = vdwg.mxu0
    %319 = vst [vmem:[#allocation2] sm:$0xff] %v316
    %v320 = vld [vmem:[#allocation2] sm:$0xff]
    %s321 = scalar_lea.vmem [#allocation3], 384
    %v322 = vld [vmem:[%s321] sm:$0xff]
    %v323 = vld [vmem:[%s321 + $0x8] sm:$0xff]
    %v324 = vld [vmem:[%s321 + $0x10] sm:$0xff]
    %v325 = vld [vmem:[%s321 + $0x18] sm:$0xff]
    %v326 = vld [vmem:[%s321 + $0x20] sm:$0xff]
    %v327 = vld [vmem:[%s321 + $0x28] sm:$0xff]
    %v328 = vld [vmem:[%s321 + $0x30] sm:$0xff]
    %v329 = vld [vmem:[%s321 + $0x38] sm:$0xff]
    %v330 = vld [vmem:[%s321 + $0x40] sm:$0xff]
    %v331 = vld [vmem:[%s321 + $0x48] sm:$0xff]
    %v332 = vld [vmem:[%s321 + $0x50] sm:$0xff]
    %v333 = vld [vmem:[%s321 + $0x58] sm:$0xff]
    %v334 = vld [vmem:[%s321 + $0x60] sm:$0xff]
    %v335 = vld [vmem:[%s321 + $0x68] sm:$0xff]
    %v336 = vld [vmem:[%s321 + $0x70] sm:$0xff]
    %v337 = vld [vmem:[%s321 + $0x78] sm:$0xff]
    %s338 = scalar_lea.vmem %s2, 3
    %v339 = vld [vmem:[%s338] sm:$0x1]
    %v341 = vlaneseq
    %v342 = vshrl.u32 %v341, 7
    %v343 = vsub.s32 0, %v342
    %v344 = vrot.slane %v339, %v343
    %346 = vmatprep.subr.mxu0 0.0
    %347 = vmatpush1.msra.mxu0 %v322
    %348 = vmatprep.subr.mxu0 0.0
    %349 = vmatpush1.msra.mxu0 %v323
    %350 = vmatprep.subr.mxu0 0.0
    %351 = vmatpush1.msra.mxu0 %v324
    %352 = vmatprep.subr.mxu0 0.0
    %353 = vmatpush1.msra.mxu0 %v325
    %354 = vmatprep.subr.mxu0 0.0
    %355 = vmatpush1.msra.mxu0 %v326
    %356 = vmatprep.subr.mxu0 0.0
    %357 = vmatpush1.msra.mxu0 %v327
    %358 = vmatprep.subr.mxu0 0.0
    %359 = vmatpush1.msra.mxu0 %v328
    %360 = vmatprep.subr.mxu0 0.0
    %361 = vmatpush1.msra.mxu0 %v329
    %362 = vmatprep.subr.mxu0 0.0
    %363 = vmatpush1.msra.mxu0 %v330
    %364 = vmatprep.subr.mxu0 0.0
    %365 = vmatpush1.msra.mxu0 %v331
    %366 = vmatprep.subr.mxu0 0.0
    %367 = vmatpush1.msra.mxu0 %v332
    %368 = vmatprep.subr.mxu0 0.0
    %369 = vmatpush1.msra.mxu0 %v333
    %370 = vmatprep.subr.mxu0 0.0
    %371 = vmatpush1.msra.mxu0 %v334
    %372 = vmatprep.subr.mxu0 0.0
    %373 = vmatpush1.msra.mxu0 %v335
    %374 = vmatprep.subr.mxu0 0.0
    %375 = vmatpush1.msra.mxu0 %v336
    %376 = vmatprep.subr.mxu0 0.0
    %377 = vmatpush1.msra.mxu0 %v337
    %378 = vmatprep.subr.mxu0 0.0
    %379 = vmatpush1.msra.mxu0 0.0
    %380 = vmatprep.subr.mxu0 0.0
    %381 = vmatpush1.msra.mxu0 0.0
    %382 = vmatprep.subr.mxu0 0.0
    %383 = vmatpush1.msra.mxu0 0.0
    %384 = vmatprep.subr.mxu0 0.0
    %385 = vmatpush1.msra.mxu0 0.0
    %386 = vmatprep.subr.mxu0 0.0
    %387 = vmatpush1.msra.mxu0 0.0
    %388 = vmatprep.subr.mxu0 0.0
    %389 = vmatpush1.msra.mxu0 0.0
    %390 = vmatprep.subr.mxu0 0.0
    %391 = vmatpush1.msra.mxu0 0.0
    %392 = vmatprep.subr.mxu0 0.0
    %393 = vmatpush1.msra.mxu0 0.0
    %394 = vmatprep.subr.mxu0 0.0
    %395 = vmatpush1.msra.mxu0 0.0
    %396 = vmatprep.subr.mxu0 0.0
    %397 = vmatpush1.msra.mxu0 0.0
    %398 = vmatprep.subr.mxu0 0.0
    %399 = vmatpush1.msra.mxu0 0.0
    %400 = vmatprep.subr.mxu0 0.0
    %401 = vmatpush1.msra.mxu0 0.0
    %402 = vmatprep.subr.mxu0 0.0
    %403 = vmatpush1.msra.mxu0 0.0
    %404 = vmatprep.subr.mxu0 0.0
    %405 = vmatpush1.msra.mxu0 0.0
    %406 = vmatprep.subr.mxu0 0.0
    %407 = vmatpush1.msra.mxu0 0.0
    %408 = vmatprep.subr.mxu0 0.0
    %409 = vmatpush1.msra.mxu0 0.0
    %410 = vmatprep.mubr.f32.mxu0 0.0
    %411 = vmatmul.mubr.f32.gmra.mrb[0].mxu0 %v320
    %v412 = vpop.f32.mrb[0].mxu0
    %v413 = vadd.f32 %v344, %v412
    %v414 = vpop.f32.mrb[0].mxu0
    %415 = vdwg.mxu0
    %416 = vst [vmem:[#allocation2] sm:$0xff] %v413
    %v417 = vld [vmem:[#allocation2] sm:$0xff]
    %418 = vst [vmem:[#allocation6] sm:$0xff] %v417
    // Predicated region
    $region18: #{my_model_forward.1} parent=1 // pred_check
      _
    $region19: #{my_model_forward.1} parent=1 // pred_check_branch
      %420 = sbr.rel (0) target = $region21
    $region20: #{my_model_forward.1} parent=1 // pred_region
      %s422 = ssub.s32 128, 128
      %423 = vsyncadd [#allocation5], %s422
      %s425 = sshll.u32 [#allocation6], 4
      %s426 = int_to_ptr.vmem [resolvable:$true] %s425
      %428 = dma.vmem_to_hbm [thread:$0]  %s426, 128, %s3, [#allocation5]
    $region21: #{my_model_forward.1} parent=1 // pred_fallthru
      _
    // Predicated region
    $region22: #{my_model_forward.1} parent=1 // pred_check
      _
    $region23: #{my_model_forward.1} parent=1 // pred_check_branch
      %430 = sbr.rel (0) target = $region25
    $region24: #{my_model_forward.1} parent=1 // pred_region
      %431 = dma.done [#allocation5], 128
    $region25: #{my_model_forward.1} parent=1 // pred_fallthru
      _
    %432 = vsyncpa [#allocation4], 1
    %433 = vsyncpa [#allocation5], 1

</llo_original>
